<compile_context>
chip_gen: v6e
topology: v6e:2x2x1
jax: 0.10.0
libtpu: 0.0.40
codegen_flags: <defaults>
</compile_context>

<pallas_src>
import functools

import jax
import jax.numpy as jnp
from jax import lax
from jax.experimental import pallas as pl
from jax.experimental.pallas import tpu as pltpu


def _round_up(x, m):
    return (x + m - 1) // m * m


# ---------------------------------------------------------------------------
# Small-problem fast path: one VMEM-resident block, no grid.
# ---------------------------------------------------------------------------
def _bilinear_small_kernel(p_ref, w_ref, a_ref, out_ref):
    # T = positive @ W ; out = T @ anchor^T (contract last dims -> no explicit
    # in-kernel transpose).
    t = lax.dot_general(
        p_ref[...], w_ref[...],
        dimension_numbers=(((1,), (0,)), ((), ())),
        preferred_element_type=jnp.float32,
    )
    out_ref[...] = lax.dot_general(
        t, a_ref[...],
        dimension_numbers=(((1,), (1,)), ((), ())),
        preferred_element_type=jnp.float32,
    ).astype(out_ref.dtype)


def _bilinear_small(positive, anchor, w):
    m, d = positive.shape
    n = anchor.shape[0]
    # Align only the contraction dim (zero padding is exact). At fast-path
    # sizes this is a few KiB and costs nothing measurable.
    dp = _round_up(d, 128)
    if dp != d:
        positive = jnp.pad(positive, ((0, 0), (0, dp - d)))
        anchor = jnp.pad(anchor, ((0, 0), (0, dp - d)))
        w = jnp.pad(w, ((0, dp - d), (0, dp - d)))
    return pl.pallas_call(
        _bilinear_small_kernel,
        out_shape=jax.ShapeDtypeStruct((m, n), positive.dtype),
    )(positive, w, anchor)


# ---------------------------------------------------------------------------
# Tiled path.
# ---------------------------------------------------------------------------
def _bilinear_tiled_kernel(a_ref, w_ref, b_ref, out_ref, t_ref, *,
                           transpose_w, swap_out):
    """One output tile of  A @ W' @ B^T  (W' = W or W^T).

    a_ref: (tm, D)  rows of the operand that gets the W projection
    w_ref: (D, D)   full weight, resident in VMEM
    b_ref: (tn, D)  rows of the other operand
    t_ref: (tm, D)  bf16 scratch caching A_tile @ W' (recomputed per i-tile)
    """
    # T depends only on the i (a-row) tile; j is the inner grid axis, so it is
    # recomputed exactly once per i-tile.
    @pl.when(pl.program_id(1) == 0)
    def _():
        w_dims = ((1,), (1,)) if transpose_w else ((1,), (0,))
        t_ref[...] = lax.dot_general(
            a_ref[...], w_ref[...],
            dimension_numbers=(w_dims, ((), ())),
            preferred_element_type=jnp.float32,
        ).astype(t_ref.dtype)

    if swap_out:
        # out tile (tn, tm) = B_tile @ T^T  -> already written in
        # (rows-of-b, rows-of-a) orientation: no wrapper-side transpose.
        out = lax.dot_general(
            b_ref[...], t_ref[...],
            dimension_numbers=(((1,), (1,)), ((), ())),
            preferred_element_type=jnp.float32,
        )
    else:
        # out tile (tm, tn) = T @ B_tile^T
        out = lax.dot_general(
            t_ref[...], b_ref[...],
            dimension_numbers=(((1,), (1,)), ((), ())),
            preferred_element_type=jnp.float32,
        )
    out_ref[...] = out.astype(out_ref.dtype)


def _tpu_vmem_budget_and_cores():
    """(usable VMEM budget in bytes, True if chip has 2 TensorCores)."""
    capacity = 64 << 20            # conservative default (v7x per-TC VMEM)
    try:
        capacity = int(pltpu.get_tpu_info().vmem_capacity_bytes)
    except Exception:
        pass
    two_tc = False
    try:
        kind = jax.devices()[0].device_kind.lower()
        two_tc = ("v7" in kind) or ("7x" in kind)
    except Exception:
        pass
    # Leave ~25% headroom for compiler-internal scratch / semaphores:
    # ~48 MiB on v7x (64 MiB/TC), ~96 MiB on v5e/v6e (128 MiB).
    return (capacity * 3) // 4, two_tc


def _choose_tiles(ma, nb, dp, cb, ob, w_bufs, budget, two_tc):
    """Largest (tm, tn) whose pipelined working set fits the VMEM budget."""
    def need(tm, tn):
        # double-buffered A, B, out; W with w_bufs buffers; bf16 T scratch.
        return (cb * (2 * tm * dp + w_bufs * dp * dp + 2 * tn * dp + tm * dp)
                + ob * 2 * tm * tn)

    # Big tm first (cuts B re-streaming and per-step overhead; exploits the
    # larger VMEM on v5e/v6e), keep the output lane dim (tn) lane-dense.
    prefs = ((2048, 512), (1024, 512), (1024, 256), (512, 512), (512, 256),
             (256, 256), (256, 128), (128, 128))
    tm = ma if ma <= 128 else 128
    tn = nb if nb <= 128 else 128
    for tm_c, tn_c in prefs:
        cand_tm = ma if ma <= tm_c else tm_c
        cand_tn = nb if nb <= tn_c else tn_c
        if need(cand_tm, cand_tn) + (4 << 20) <= budget:
            tm, tn = cand_tm, cand_tn
            break
    # TODO(synk): for very large D (W not fitting resident in VMEM) add a
    # D-reduction grid axis instead of keeping W whole.

    # v7x megacore: the i axis is "parallel"; make sure there are >= 2 i-tiles
    # so the second TensorCore has work (costs one extra B re-stream, which is
    # why it is gated on the 2-TC chips only).
    if two_tc and ma >= 512 and pl.cdiv(ma, tm) < 2:
        tm = _round_up(pl.cdiv(ma, 2), 256)
    return tm, tn, need(tm, tn)


def _bilinear_tiled(a, w, b, *, transpose_w, swap_out, out_dtype):
    """a @ W' @ b.T with a:(Ma,D), b:(Nb,D), W' = w.T if transpose_w.

    If swap_out, the kernel writes the transposed orientation directly, i.e.
    returns an (Nb, Ma) array equal to b @ W'^T @ a.T — no trailing transpose.
    """
    ma, d = a.shape
    nb = b.shape[0]

    # bf16 MXU feeds, f32 accumulation inside the kernel.
    compute_dtype = jnp.bfloat16 if a.dtype == jnp.float32 else a.dtype
    cb = jnp.dtype(compute_dtype).itemsize
    ob = jnp.dtype(out_dtype).itemsize

    a = a.astype(compute_dtype)
    b = b.astype(compute_dtype)
    w = w.astype(compute_dtype)

    # Only the contraction dim ever needs zero padding (exact), and only when
    # D is not lane-aligned; M/N edges are handled by cdiv grids with masked
    # edge blocks (garbage rows/cols land outside the stored output).
    dp = _round_up(d, 128)
    if dp != d:
        a = jnp.pad(a, ((0, 0), (0, dp - d)))
        b = jnp.pad(b, ((0, 0), (0, dp - d)))
        w = jnp.pad(w, ((0, dp - d), (0, dp - d)))

    budget, two_tc = _tpu_vmem_budget_and_cores()

    def run(w_bufs):
        tm, tn, needed = _choose_tiles(ma, nb, dp, cb, ob, w_bufs, budget,
                                       two_tc)
        grid = (pl.cdiv(ma, tm), pl.cdiv(nb, tn))

        if w_bufs == 1:
            # W has a constant index_map (DMA'd once); a single buffer halves
            # its VMEM residency.
            w_spec = pl.BlockSpec((dp, dp), lambda i, j: (0, 0),
                                  pipeline_mode=pl.Buffered(1))
        else:
            w_spec = pl.BlockSpec((dp, dp), lambda i, j: (0, 0))

        if swap_out:
            out_shape = jax.ShapeDtypeStruct((nb, ma), out_dtype)
            out_spec = pl.BlockSpec((tn, tm), lambda i, j: (j, i))
        else:
            out_shape = jax.ShapeDtypeStruct((ma, nb), out_dtype)
            out_spec = pl.BlockSpec((tm, tn), lambda i, j: (i, j))

        # Never let the limit clamp below what the pipeline actually needs.
        vmem_limit = max(needed + (2 << 20), 32 << 20)
        vmem_limit = min(vmem_limit, max(budget, needed + (2 << 20)))

        cost = pl.CostEstimate(
            flops=2 * ma * dp * dp + 2 * ma * nb * dp,
            transcendentals=0,
            bytes_accessed=cb * (ma * dp + dp * dp
                                 + nb * dp * pl.cdiv(ma, tm)) + ob * ma * nb,
        )

        kernel = functools.partial(_bilinear_tiled_kernel,
                                   transpose_w=transpose_w, swap_out=swap_out)
        return pl.pallas_call(
            kernel,
            out_shape=out_shape,
            grid_spec=pltpu.PrefetchScalarGridSpec(
                num_scalar_prefetch=0,
                grid=grid,
                in_specs=[
                    pl.BlockSpec((tm, dp), lambda i, j: (i, 0)),   # A row tile
                    w_spec,                                        # W resident
                    pl.BlockSpec((tn, dp), lambda i, j: (j, 0)),   # B row tile
                ],
                out_specs=out_spec,
                scratch_shapes=[pltpu.VMEM((tm, dp), compute_dtype)],  # T
            ),
            compiler_params=pltpu.CompilerParams(
                # i-tiles are independent -> megacore-parallel; j carries the
                # T scratch, so it must stay "arbitrary".
                dimension_semantics=("parallel", "arbitrary"),
                vmem_limit_bytes=int(vmem_limit),
            ),
            cost_estimate=cost,
        )(a, w, b)

    try:
        return run(w_bufs=1)       # single-buffered resident W
    except Exception:
        # JAX/Mosaic versions without BlockSpec(pipeline_mode=...) support:
        # fall back to the default double-buffered W (same semantics).
        return run(w_bufs=2)


# ---------------------------------------------------------------------------
# Public entry point — same forward semantics as the PyTorch module.
# ---------------------------------------------------------------------------
def bilinear_product(positive, anchor, w):
    """positive: (B_pos, D), anchor: (B_anc, D), w: (D, D) -> (B_pos, B_anc).

    out = positive @ (w @ anchor.T)
    """
    b_pos, d = positive.shape
    b_anc, d2 = anchor.shape
    assert d == d2 == w.shape[0] == w.shape[1]
    out_dtype = positive.dtype

    # Small problems: a single VMEM-resident block beats any grid (no padding
    # traffic, no per-step overhead) and keeps full f32 precision.
    if b_pos <= 256 and b_anc <= 256 and d <= 512:
        return _bilinear_small(positive, anchor, w)

    # Put the W projection on the smaller batch (fewest D x D-contraction
    # FLOPs); swap_out keeps the output (B_pos, B_anc)-oriented with no w.T
    # copy and no trailing transpose.
    if b_pos <= b_anc:
        # T = positive @ W ; out = T @ anchor^T
        return _bilinear_tiled(positive, w, anchor, transpose_w=False,
                               swap_out=False, out_dtype=out_dtype)
    else:
        # T = anchor @ W^T ; out = positive @ T^T   (written as (B_pos, B_anc))
        return _bilinear_tiled(anchor, w, positive, transpose_w=True,
                               swap_out=True, out_dtype=out_dtype)


if __name__ == "__main__":
    key = jax.random.PRNGKey(0)
    k_w, k_pos, k_anc, k_pos_b, k_w2, k_pos2, k_anc2 = jax.random.split(key, 7)

    # --- Module-sized case (dim=32, small batches) -> fast single-block path.
    dim = 32
    epsilon = 0.13
    w = jnp.zeros((dim, dim), jnp.float32) + jax.random.normal(
        k_w, (dim, dim), jnp.float32) * epsilon
    positive = jax.random.normal(k_pos, (8, dim), jnp.float32)
    anchor = jax.random.normal(k_anc, (8, dim), jnp.float32)

    out = jax.block_until_ready(bilinear_product(positive, anchor, w))
    ref = positive @ (w @ anchor.T)
    assert out.shape == (8, 8)
    assert jnp.allclose(out, ref, atol=1e-4, rtol=1e-4)

    positive_b = jax.random.normal(k_pos_b, (16, dim), jnp.float32)
    out_b = jax.block_until_ready(bilinear_product(positive_b, anchor, w))
    ref_b = positive_b @ (w @ anchor.T)
    assert out_b.shape == (16, 8)
    assert jnp.allclose(out_b, ref_b, atol=1e-4, rtol=1e-4)

    # --- Larger case exercising the tiled bf16 kernel, both branches.
    dim2 = 256
    w2 = jax.random.normal(k_w2, (dim2, dim2), jnp.float32) * epsilon
    pos2 = jax.random.normal(k_pos2, (640, dim2), jnp.float32)
    anc2 = jax.random.normal(k_anc2, (384, dim2), jnp.float32)

    out2 = jax.block_until_ready(bilinear_product(pos2, anc2, w2))   # swap branch
    out3 = jax.block_until_ready(bilinear_product(anc2, pos2, w2))   # plain branch
    ref2 = pos2 @ (w2 @ anc2.T)
    ref3 = anc2 @ (w2 @ pos2.T)
    assert out2.shape == (640, 384) and out3.shape == (384, 640)
    # bf16 MXU feeds + bf16 T cache with f32 accumulation -> loose tolerance.
    assert jnp.allclose(out2, ref2, rtol=2e-2, atol=2.0)
    assert jnp.allclose(out3, ref3, rtol=2e-2, atol=2.0)

    print("KERNEL_OK")
</pallas_src>

<mosaic_0001>
module attributes {stable_mosaic.version = 11 : i64} {
  func.func @_bilinear_small_kernel(%arg0: memref<8x128xf32, #tpu.memory_space<vmem>>, %arg1: memref<128x128xf32, #tpu.memory_space<vmem>>, %arg2: memref<8x128xf32, #tpu.memory_space<vmem>>, %arg3: memref<8x8xf32, #tpu.memory_space<vmem>>) attributes {dimension_semantics = [], scalar_prefetch = 0 : i64, scratch_operands = 0 : i64, tpu.core_type = #tpu.core_type<tc>} {
    %c0 = arith.constant 0 : index
    %c0_0 = arith.constant 0 : index
    %0 = vector.load %arg0[%c0, %c0_0] : memref<8x128xf32, #tpu.memory_space<vmem>>, vector<8x128xf32>
    %c0_1 = arith.constant 0 : index
    %c0_2 = arith.constant 0 : index
    %1 = vector.load %arg1[%c0_1, %c0_2] : memref<128x128xf32, #tpu.memory_space<vmem>>, vector<128x128xf32>
    %cst = arith.constant dense<0.000000e+00> : vector<8x128xf32>
    %2 = tpu.matmul %0, %1, %cst {dimension_numbers = #tpu.dot_dimension_numbers<[1], [0], [0], [1], [0, 0, 1, 1], [], []>} : vector<8x128xf32>, vector<128x128xf32>, vector<8x128xf32> -> vector<8x128xf32>
    %c0_3 = arith.constant 0 : index
    %c0_4 = arith.constant 0 : index
    %3 = vector.load %arg2[%c0_3, %c0_4] : memref<8x128xf32, #tpu.memory_space<vmem>>, vector<8x128xf32>
    %cst_5 = arith.constant dense<0.000000e+00> : vector<8x8xf32>
    %4 = tpu.matmul %2, %3, %cst_5 {dimension_numbers = #tpu.dot_dimension_numbers<[1], [1], [0], [0], [0, 0, 1, 0], [], []>} : vector<8x128xf32>, vector<8x128xf32>, vector<8x8xf32> -> vector<8x8xf32>
    %c0_6 = arith.constant 0 : index
    %c0_7 = arith.constant 0 : index
    %5 = vector.load %arg3[%c0_6, %c0_7] : memref<8x8xf32, #tpu.memory_space<vmem>>, vector<8x8xf32>
    tpu.vector_store %arg3[%c0_6, %c0_7], %4 {strides = array<i32>} : memref<8x8xf32, #tpu.memory_space<vmem>>, vector<8x8xf32>,
    return
  }
}

</mosaic_0001>

<llo_original>
// kernel: tpu_custom_call.1
$region0: #{tpu_custom_call.1}
  #allocation0 [shape = 'u32[]', space=smem, size = 0x4, offset = 0x4, fixed_abs, tag = 'smem constant byte address 0x4 - core index']
  #allocation1 [shape = 'u32[144,128]{1,0:T(1,128)}', space=vmem, size = 0x12000, scoped, tag = 'internal scratch']
  %s0 = inlined_call_operand.hbm [shape: f32[8,128], index: 0, kind: input, shape index: {}]
  %s1 = inlined_call_operand.hbm [shape: f32[128,128], index: 1, kind: input, shape index: {}]
  %s2 = inlined_call_operand.hbm [shape: f32[8,128], index: 2, kind: input, shape index: {}]
  %s3 = inlined_call_operand.hbm [shape: f32[8,8], index: 3, kind: output, shape index: {}]
  %s4 = sld [smem:[#allocation0]]
  $region34: #{tpu_custom_call.1} parent=0
    _
  %s6 = ssub.s32 1, %s4
  %s7 = scalar_select 0, %s6, %s4
  $region1: #{tpu_custom_call.1} parent=0
    #allocation2 [shape = 'u8[4096]{0}', space=vmem, size = 0x1000, scoped, tag = 'input window, operand 0, single buffered']
    #allocation3 [shape = 's32[1]{0}', space=sflag, size = 0x4, scoped, tag = 'scoped memory for tpu_custom_call.1']
    #allocation4 [shape = 's32[1]{0}', space=sflag, size = 0x4, scoped, tag = 'scoped memory for tpu_custom_call.1']
    #allocation5 [shape = 'u8[65536]{0}', space=vmem, size = 0x10000, scoped, tag = 'input window, operand 1, single buffered']
    #allocation6 [shape = 's32[1]{0}', space=sflag, size = 0x4, scoped, tag = 'scoped memory for tpu_custom_call.1']
    #allocation7 [shape = 'u8[4096]{0}', space=vmem, size = 0x1000, scoped, tag = 'input window, operand 2, single buffered']
    #allocation8 [shape = 'u8[4096]{0}', space=vmem, size = 0x1000, scoped, tag = 'output window, operand 0, single buffered']
    %8 = vsyncpa [#allocation3], 0
    %9 = vsyncpa [#allocation6], 0
    %10 = vsyncpa [#allocation4], 0
    // Predicated region
    $region2: #{tpu_custom_call.1} parent=1 // pred_check
      _
    $region3: #{tpu_custom_call.1} parent=1 // pred_check_branch
      %12 = sbr.rel (0) target = $region5
    $region4: #{tpu_custom_call.1} parent=1 // pred_region
      %s14 = ssub.s32 128, 128
      %15 = vsyncadd [#allocation3], %s14
      %s17 = sshll.u32 [#allocation2], 4
      %s18 = int_to_ptr.vmem [resolvable:$true] %s17
      %20 = dma.hbm_to_vmem [thread:$0]  %s0, 128, %s18, [#allocation3]
    $region5: #{tpu_custom_call.1} parent=1 // pred_fallthru
      _
    // Predicated region
    $region6: #{tpu_custom_call.1} parent=1 // pred_check
      _
    $region7: #{tpu_custom_call.1} parent=1 // pred_check_branch
      %22 = sbr.rel (0) target = $region9
    $region8: #{tpu_custom_call.1} parent=1 // pred_region
      %s24 = ssub.s32 2048, 2048
      %25 = vsyncadd [#allocation6], %s24
      %s26 = sshll.u32 [#allocation5], 4
      %s27 = int_to_ptr.vmem [resolvable:$true] %s26
      %32 = dma.hbm_to_vmem [thread:$0]  %s1, 2048, %s27, [#allocation6], 128, 128, 8
    $region9: #{tpu_custom_call.1} parent=1 // pred_fallthru
      _
    // Predicated region
    $region10: #{tpu_custom_call.1} parent=1 // pred_check
      _
    $region11: #{tpu_custom_call.1} parent=1 // pred_check_branch
      %34 = sbr.rel (0) target = $region13
    $region12: #{tpu_custom_call.1} parent=1 // pred_region
      %s36 = ssub.s32 128, 128
      %37 = vsyncadd [#allocation6], %s36
      %s39 = sshll.u32 [#allocation7], 4
      %s40 = int_to_ptr.vmem [resolvable:$true] %s39
      %42 = dma.hbm_to_vmem [thread:$0]  %s2, 128, %s40, [#allocation6]
    $region13: #{tpu_custom_call.1} parent=1 // pred_fallthru
      _
    // Predicated region
    $region14: #{tpu_custom_call.1} parent=1 // pred_check
      _
    $region15: #{tpu_custom_call.1} parent=1 // pred_check_branch
      %44 = sbr.rel (0) target = $region17
    $region16: #{tpu_custom_call.1} parent=1 // pred_region
      %45 = dma.done [#allocation3], 128
    $region17: #{tpu_custom_call.1} parent=1 // pred_fallthru
      _
    // Predicated region
    $region18: #{tpu_custom_call.1} parent=1 // pred_check
      _
    $region19: #{tpu_custom_call.1} parent=1 // pred_check_branch
      %47 = sbr.rel (0) target = $region21
    $region20: #{tpu_custom_call.1} parent=1 // pred_region
      %48 = dma.done [#allocation6], 2048
    $region21: #{tpu_custom_call.1} parent=1 // pred_fallthru
      _
    // Predicated region
    $region22: #{tpu_custom_call.1} parent=1 // pred_check
      _
    $region23: #{tpu_custom_call.1} parent=1 // pred_check_branch
      %50 = sbr.rel (0) target = $region25
    $region24: #{tpu_custom_call.1} parent=1 // pred_region
      %51 = dma.done [#allocation6], 128
    $region25: #{tpu_custom_call.1} parent=1 // pred_fallthru
      _
    %v52 = vld [vmem:[#allocation2] sm:$0xff]
    %v53 = vld [vmem:[#allocation5] sm:$0xff]
    %v54 = vld [vmem:[#allocation5 + $0x8] sm:$0xff]
    %v55 = vld [vmem:[#allocation5 + $0x10] sm:$0xff]
    %v56 = vld [vmem:[#allocation5 + $0x18] sm:$0xff]
    %v57 = vld [vmem:[#allocation5 + $0x20] sm:$0xff]
    %v58 = vld [vmem:[#allocation5 + $0x28] sm:$0xff]
    %v59 = vld [vmem:[#allocation5 + $0x30] sm:$0xff]
    %v60 = vld [vmem:[#allocation5 + $0x38] sm:$0xff]
    %v61 = vld [vmem:[#allocation5 + $0x40] sm:$0xff]
    %v62 = vld [vmem:[#allocation5 + $0x48] sm:$0xff]
    %v63 = vld [vmem:[#allocation5 + $0x50] sm:$0xff]
    %v64 = vld [vmem:[#allocation5 + $0x58] sm:$0xff]
    %v65 = vld [vmem:[#allocation5 + $0x60] sm:$0xff]
    %v66 = vld [vmem:[#allocation5 + $0x68] sm:$0xff]
    %v67 = vld [vmem:[#allocation5 + $0x70] sm:$0xff]
    %v68 = vld [vmem:[#allocation5 + $0x78] sm:$0xff]
    %69 = vmatprep.subr.mxu0 0.0
    %70 = vmatpush1.msra.mxu0 %v68
    %71 = vmatprep.subr.mxu0 0.0
    %72 = vmatpush1.msra.mxu0 %v67
    %73 = vmatprep.subr.mxu0 0.0
    %74 = vmatpush1.msra.mxu0 %v66
    %75 = vmatprep.subr.mxu0 0.0
    %76 = vmatpush1.msra.mxu0 %v65
    %77 = vmatprep.subr.mxu0 0.0
    %78 = vmatpush1.msra.mxu0 %v64
    %79 = vmatprep.subr.mxu0 0.0
    %80 = vmatpush1.msra.mxu0 %v63
    %81 = vmatprep.subr.mxu0 0.0
    %82 = vmatpush1.msra.mxu0 %v62
    %83 = vmatprep.subr.mxu0 0.0
    %84 = vmatpush1.msra.mxu0 %v61
    %85 = vmatprep.subr.mxu0 0.0
    %86 = vmatpush1.msra.mxu0 %v60
    %87 = vmatprep.subr.mxu0 0.0
    %88 = vmatpush1.msra.mxu0 %v59
    %89 = vmatprep.subr.mxu0 0.0
    %90 = vmatpush1.msra.mxu0 %v58
    %91 = vmatprep.subr.mxu0 0.0
    %92 = vmatpush1.msra.mxu0 %v57
    %93 = vmatprep.subr.mxu0 0.0
    %94 = vmatpush1.msra.mxu0 %v56
    %95 = vmatprep.subr.mxu0 0.0
    %96 = vmatpush1.msra.mxu0 %v55
    %97 = vmatprep.subr.mxu0 0.0
    %98 = vmatpush1.msra.mxu0 %v54
    %99 = vmatprep.subr.mxu0 0.0
    %100 = vmatpush1.msra.mxu0 %v53
    %101 = vmatprep.subr.mxu0 0.0
    %102 = vmatpush2.msra.mxu0 0.0
    %103 = vmatprep.subr.mxu0 0.0
    %104 = vmatpush2.msra.mxu0 0.0
    %105 = vmatprep.subr.mxu0 0.0
    %106 = vmatpush2.msra.mxu0 0.0
    %107 = vmatprep.subr.mxu0 0.0
    %108 = vmatpush2.msra.mxu0 0.0
    %109 = vmatprep.subr.mxu0 0.0
    %110 = vmatpush2.msra.mxu0 0.0
    %111 = vmatprep.subr.mxu0 0.0
    %112 = vmatpush2.msra.mxu0 0.0
    %113 = vmatprep.subr.mxu0 0.0
    %114 = vmatpush2.msra.mxu0 0.0
    %115 = vmatprep.subr.mxu0 0.0
    %116 = vmatpush2.msra.mxu0 0.0
    %117 = vmatprep.subr.mxu0 0.0
    %118 = vmatpush2.msra.mxu0 0.0
    %119 = vmatprep.subr.mxu0 0.0
    %120 = vmatpush2.msra.mxu0 0.0
    %121 = vmatprep.subr.mxu0 0.0
    %122 = vmatpush2.msra.mxu0 0.0
    %123 = vmatprep.subr.mxu0 0.0
    %124 = vmatpush2.msra.mxu0 0.0
    %125 = vmatprep.subr.mxu0 0.0
    %126 = vmatpush2.msra.mxu0 0.0
    %127 = vmatprep.subr.mxu0 0.0
    %128 = vmatpush2.msra.mxu0 0.0
    %129 = vmatprep.subr.mxu0 0.0
    %130 = vmatpush2.msra.mxu0 0.0
    %131 = vmatprep.subr.mxu0 0.0
    %132 = vmatpush2.msra.mxu0 0.0
    %133 = vmatprep.mubr.f32.mxu0 0.0
    %134 = vmatmul.mubr.f32.gmra.mxu0 %v52
    %v135 = vpop.f32.mrf.mxu0
    %v136 = vadd.f32 0.0, %v135
    %v137 = vpop.f32.mrf.mxu0
    %138 = vdwg.mxu0
    %v139 = vld [vmem:[#allocation7] sm:$0xff]
    %140 = vmatprep.subr.mxu0 0.0
    %141 = vmatpush1.xpose.msra.mxu0 0.0
    %142 = vmatprep.subr.mxu0 0.0
    %143 = vmatpush1.xpose.msra.mxu0 0.0
    %144 = vmatprep.subr.mxu0 0.0
    %145 = vmatpush1.xpose.msra.mxu0 0.0
    %146 = vmatprep.subr.mxu0 0.0
    %147 = vmatpush1.xpose.msra.mxu0 0.0
    %148 = vmatprep.subr.mxu0 0.0
    %149 = vmatpush1.xpose.msra.mxu0 0.0
    %150 = vmatprep.subr.mxu0 0.0
    %151 = vmatpush1.xpose.msra.mxu0 0.0
    %152 = vmatprep.subr.mxu0 0.0
    %153 = vmatpush1.xpose.msra.mxu0 0.0
    %154 = vmatprep.subr.mxu0 0.0
    %155 = vmatpush1.xpose.msra.mxu0 0.0
    %156 = vmatprep.subr.mxu0 0.0
    %157 = vmatpush1.xpose.msra.mxu0 0.0
    %158 = vmatprep.subr.mxu0 0.0
    %159 = vmatpush1.xpose.msra.mxu0 0.0
    %160 = vmatprep.subr.mxu0 0.0
    %161 = vmatpush1.xpose.msra.mxu0 0.0
    %162 = vmatprep.subr.mxu0 0.0
    %163 = vmatpush1.xpose.msra.mxu0 0.0
    %164 = vmatprep.subr.mxu0 0.0
    %165 = vmatpush1.xpose.msra.mxu0 0.0
    %166 = vmatprep.subr.mxu0 0.0
    %167 = vmatpush1.xpose.msra.mxu0 0.0
    %168 = vmatprep.subr.mxu0 0.0
    %169 = vmatpush1.xpose.msra.mxu0 0.0
    %170 = vmatprep.subr.mxu0 0.0
    %171 = vmatpush1.xpose.msra.mxu0 %v139
    %172 = vmatprep.subr.mxu0 0.0
    %173 = vmatpush2.xpose.msra.mxu0 0.0
    %174 = vmatprep.subr.mxu0 0.0
    %175 = vmatpush2.xpose.msra.mxu0 0.0
    %176 = vmatprep.subr.mxu0 0.0
    %177 = vmatpush2.xpose.msra.mxu0 0.0
    %178 = vmatprep.subr.mxu0 0.0
    %179 = vmatpush2.xpose.msra.mxu0 0.0
    %180 = vmatprep.subr.mxu0 0.0
    %181 = vmatpush2.xpose.msra.mxu0 0.0
    %182 = vmatprep.subr.mxu0 0.0
    %183 = vmatpush2.xpose.msra.mxu0 0.0
    %184 = vmatprep.subr.mxu0 0.0
    %185 = vmatpush2.xpose.msra.mxu0 0.0
    %186 = vmatprep.subr.mxu0 0.0
    %187 = vmatpush2.xpose.msra.mxu0 0.0
    %188 = vmatprep.subr.mxu0 0.0
    %189 = vmatpush2.xpose.msra.mxu0 0.0
    %190 = vmatprep.subr.mxu0 0.0
    %191 = vmatpush2.xpose.msra.mxu0 0.0
    %192 = vmatprep.subr.mxu0 0.0
    %193 = vmatpush2.xpose.msra.mxu0 0.0
    %194 = vmatprep.subr.mxu0 0.0
    %195 = vmatpush2.xpose.msra.mxu0 0.0
    %196 = vmatprep.subr.mxu0 0.0
    %197 = vmatpush2.xpose.msra.mxu0 0.0
    %198 = vmatprep.subr.mxu0 0.0
    %199 = vmatpush2.xpose.msra.mxu0 0.0
    %200 = vmatprep.subr.mxu0 0.0
    %201 = vmatpush2.xpose.msra.mxu0 0.0
    %202 = vmatprep.subr.mxu0 0.0
    %203 = vmatpush2.xpose.msra.mxu0 0.0
    %204 = vmatprep.mubr.f32.mxu0 0.0
    %205 = vmatmul.mubr.f32.gmra.mxu0 %v136
    %v206 = vpop.f32.mrf.mxu0
    %v207 = vadd.f32 0.0, %v206
    %v208 = vpop.f32.mrf.mxu0
    %209 = vdwg.mxu0
    %vm210 = vcmask 64512
    %211 = vst.msk [vmem:[#allocation8] sm:$0xff] %vm210, %v207
    // Predicated region
    $region26: #{tpu_custom_call.1} parent=1 // pred_check
      _
    $region27: #{tpu_custom_call.1} parent=1 // pred_check_branch
      %213 = sbr.rel (0) target = $region29
    $region28: #{tpu_custom_call.1} parent=1 // pred_region
      %s215 = ssub.s32 128, 128
      %216 = vsyncadd [#allocation4], %s215
      %s218 = sshll.u32 [#allocation8], 4
      %s219 = int_to_ptr.vmem [resolvable:$true] %s218
      %221 = dma.vmem_to_hbm [thread:$0]  %s219, 128, %s3, [#allocation4]
    $region29: #{tpu_custom_call.1} parent=1 // pred_fallthru
      _
    // Predicated region
    $region30: #{tpu_custom_call.1} parent=1 // pred_check
      _
    $region31: #{tpu_custom_call.1} parent=1 // pred_check_branch
      %223 = sbr.rel (0) target = $region33
    $region32: #{tpu_custom_call.1} parent=1 // pred_region
      %224 = dma.done [#allocation4], 128
    $region33: #{tpu_custom_call.1} parent=1 // pred_fallthru
      _
    %225 = vsyncpa [#allocation3], 1
    %226 = vsyncpa [#allocation6], 1
    %227 = vsyncpa [#allocation4], 1

</llo_original>
